<compile_context>
chip_gen: v6e
topology: v6e:2x2x1
jax: 0.10.0
libtpu: 0.0.40
codegen_flags: <defaults>
</compile_context>

<pallas_src>
import functools

import jax
import jax.numpy as jnp
import numpy as np
from jax.experimental import pallas as pl
from jax.experimental.pallas import tpu as pltpu

DILATIONS = (2, 4, 8, 16)
KSIZE = 3
BN_EPS = 1e-5


# ----------------------------------------------------------------------------------
# One-time probe of pltpu.roll's rotation convention (tiny kernel, cached).
# Guards the dilated-tap construction against any sign-convention difference.
# ----------------------------------------------------------------------------------
@functools.cache
def _roll_matches_jnp_roll():
    """True iff pltpu.roll(x, s, axis=0)[i] == x[(i - s) % N] (jnp.roll semantics)."""
    def probe(x_ref, o_ref):
        o_ref[...] = pltpu.roll(x_ref[...], 1, axis=0)

    x = jnp.broadcast_to(jnp.arange(8, dtype=jnp.float32)[:, None], (8, 128))
    out = pl.pallas_call(
        probe, out_shape=jax.ShapeDtypeStruct((8, 128), jnp.float32))(x)
    return bool(out[1, 0] == 0.0)


# ----------------------------------------------------------------------------------
# Pallas kernel
# ----------------------------------------------------------------------------------
def _build_kernel(TB, L, C, roll_forward):
    """TB: batch rows per grid step, L: sequence length, C: TCN channels."""
    BL = TB * L

    def kernel(x_ref, *refs):
        out_ref = refs[-1]
        params = refs[:-1]

        x = x_ref[...].astype(jnp.float32)             # (TB, L, Cin)
        cin = x.shape[-1]
        h = x.reshape(BL, cin)                         # 2-D activations for the whole TCN

        # time position of every flattened row; masks both the conv's zero padding and
        # batch boundaries of the (B*L, C) layout.
        t_idx = jax.lax.broadcasted_iota(jnp.int32, (TB, L, 1), 1).reshape(BL, 1)

        def shift_rows(a, off):
            # a[row + off] along the flattened time axis (wraparound rows masked by caller).
            s = (-off) % BL if roll_forward else off % BL
            return pltpu.roll(a, s, axis=0)            # rides the XLU rotate slot

        def conv_im2col(a, w, b, d):
            """'same' dilated Conv1d (K=3, BN folded) as ONE im2col matmul.
            a: (BL, Cm) f32,  w: (3*Cm, Cout) MXU dtype,  b: (1, Cout) f32."""
            left = jnp.where(t_idx >= d, shift_rows(a, -d), 0.0)      # a[t - d]
            right = jnp.where(t_idx < L - d, shift_rows(a, d), 0.0)   # a[t + d]
            slab = jnp.concatenate([left, a, right], axis=1)          # (BL, 3*Cm)
            y = jnp.dot(slab.astype(w.dtype), w, preferred_element_type=jnp.float32)
            return y + b

        idx = 0
        for blk in range(4):
            d = DILATIONS[blk]
            w1 = params[idx][...]
            b1 = params[idx + 1][...]
            w2 = params[idx + 2][...]
            b2 = params[idx + 3][...]
            idx += 4

            y1 = conv_im2col(h, w1, b1, d)             # conv1 + BN (folded)
            if blk == 0:
                # block 0: w1 is augmented with the 1x1-downsample columns, so one
                # matmul yields both the conv1 pre-activation and the residual path.
                o = jnp.maximum(y1[:, :C], 0.0)
                res = y1[:, C:]
            else:
                o = jnp.maximum(y1, 0.0)
                res = h
            o = jnp.maximum(conv_im2col(o, w2, b2, d), 0.0)   # conv2 + BN + ReLU
            # TODO(synk): dropout is eval-mode identity (train-mode mask omitted).
            h = o + res                                        # (BL, C)

        fc1_w = params[idx][...]
        fc1_b = params[idx + 1][...]
        fc2_w = params[idx + 2][...]
        fc2_b = params[idx + 3][...]

        # attention pooling: softmax over time of the channel mean
        h3 = h.reshape(TB, L, C)
        m = jnp.mean(h3, axis=-1)                              # (TB, L)
        e = jnp.exp(m - jnp.max(m, axis=-1, keepdims=True))
        inv = pl.reciprocal(jnp.sum(e, axis=-1, keepdims=True), approx=True)
        w_att = e * inv                                        # (TB, L)
        pooled = jnp.sum(h3 * w_att[:, :, None], axis=1)       # (TB, C)

        z = jnp.dot(pooled.astype(fc1_w.dtype), fc1_w,
                    preferred_element_type=jnp.float32) + fc1_b
        z = z * jax.nn.sigmoid(z)                              # SiLU (BN folded into fc1)
        # fc2 is (TB, F) @ (F, 1): keep it on the VPU (mul + lane reduce), not the MXU.
        y = jnp.sum(z * fc2_w, axis=-1, keepdims=True) + fc2_b
        out_ref[...] = y.astype(out_ref.dtype)

    return kernel


def eth_spot_forward(x, flat_params, *, batch_tile=None):
    B, L, d_in = x.shape
    TB = batch_tile if batch_tile is not None else B
    assert B % TB == 0, "batch must be divisible by batch_tile"
    C = flat_params[2].shape[-1]                    # block-0 conv2 weight: (3C, C)
    kernel = _build_kernel(TB, L, C, _roll_matches_jnp_roll())

    param_specs = [pl.BlockSpec(p.shape, lambda b: (0, 0)) for p in flat_params]
    return pl.pallas_call(
        kernel,
        grid=(B // TB,),
        out_shape=jax.ShapeDtypeStruct((B, 1), jnp.float32),
        in_specs=[pl.BlockSpec((TB, L, d_in), lambda b: (b, 0, 0))] + param_specs,
        out_specs=pl.BlockSpec((TB, 1), lambda b: (b, 0)),
        compiler_params=pltpu.CompilerParams(
            dimension_semantics=("parallel",),
            vmem_limit_bytes=32 * 1024 * 1024),
    )(x, *flat_params)


# ----------------------------------------------------------------------------------
# Deterministic parameter construction (PyTorch-style shapes)
# ----------------------------------------------------------------------------------
def make_params(key, input_dim, C, F):
    keys = iter(jax.random.split(key, 64))

    def nrm(shape, std=1.0):
        return jax.random.normal(next(keys), shape, jnp.float32) * std

    raw = {'blocks': [], 'fc': {}}
    cin = input_dim
    for blk in range(4):
        block = dict(
            w1=nrm((C, cin, KSIZE), (2.0 / (C * KSIZE)) ** 0.5),   # kaiming fan_out
            b1=jnp.zeros((C,), jnp.float32),
            g1=1.0 + 0.05 * nrm((C,)), be1=0.05 * nrm((C,)),
            w2=nrm((C, C, KSIZE), (2.0 / (C * KSIZE)) ** 0.5),
            b2=jnp.zeros((C,), jnp.float32),
            g2=1.0 + 0.05 * nrm((C,)), be2=0.05 * nrm((C,)),
        )
        if blk == 0:  # n_inputs != n_outputs -> downsample branch
            block['ds_w'] = nrm((C, cin, 1), (2.0 / cin) ** 0.5)
            block['ds_b'] = jnp.zeros((C,), jnp.float32)
            block['ds_g'] = 1.0 + 0.05 * nrm((C,))
            block['ds_be'] = 0.05 * nrm((C,))
        raw['blocks'].append(block)
        cin = C

    raw['fc'] = dict(
        fc1_w=nrm((F, C), (1.0 / C) ** 0.5), fc1_b=0.01 * nrm((F,)),
        g=1.0 + 0.05 * nrm((F,)), be=0.05 * nrm((F,)),
        fc2_w=nrm((1, F), (1.0 / F) ** 0.5), fc2_b=0.01 * nrm((1,)),
    )
    return raw


def fold_params(raw, mxu_dtype=jnp.float32):
    """Fold eval-mode BatchNorm (running mean=0, var=1) into conv/linear weights and
    prepack everything host-side into exactly the layouts the kernel consumes:
      * conv weights -> im2col (K*Cin, Cout) in the MXU dtype
      * block-0 downsample folded into conv1's weight as extra output columns
      * biases / fc2 row vector stay f32 (VPU path)."""
    inv = 1.0 / jnp.sqrt(1.0 + BN_EPS)
    flat = []

    def fold_conv(w, b, g, be):
        scale = g * inv
        wk = jnp.transpose(w, (2, 1, 0)) * scale[None, None, :]   # (K, Cin, Cout)
        wk = wk.reshape(-1, w.shape[0])                           # (K*Cin, Cout)
        bk = (b * scale + be)[None, :]                            # (1, Cout)
        return wk, bk

    for bi, block in enumerate(raw['blocks']):
        w1, b1 = fold_conv(block['w1'], block['b1'], block['g1'], block['be1'])
        w2, b2 = fold_conv(block['w2'], block['b2'], block['g2'], block['be2'])
        if bi == 0:
            # 1x1 downsample conv + BN -> extra output columns of conv1 that read only
            # the centre tap rows of the im2col slab.
            cin = block['ds_w'].shape[1]
            ds_scale = block['ds_g'] * inv
            ds_mat = block['ds_w'][:, :, 0].T * ds_scale[None, :]           # (Cin, C)
            ds_aug = jnp.zeros((KSIZE * cin, ds_mat.shape[1]), jnp.float32)
            ds_aug = ds_aug.at[cin:2 * cin, :].set(ds_mat)
            ds_b = (block['ds_b'] * ds_scale + block['ds_be'])[None, :]
            w1 = jnp.concatenate([w1, ds_aug], axis=1)                      # (3Cin, 2C)
            b1 = jnp.concatenate([b1, ds_b], axis=1)                        # (1, 2C)
        flat += [w1.astype(mxu_dtype), b1, w2.astype(mxu_dtype), b2]

    fc = raw['fc']
    scale = fc['g'] * inv
    flat += [
        (fc['fc1_w'].T * scale[None, :]).astype(mxu_dtype),   # (C, F)
        (fc['fc1_b'] * scale + fc['be'])[None, :],            # (1, F)
        fc['fc2_w'],                                          # (1, F)  f32 (VPU reduce)
        fc['fc2_b'][None, :],                                 # (1, 1)
    ]
    return flat


# ----------------------------------------------------------------------------------
# Pure-JAX reference in PyTorch (NCL) layout for validation
# ----------------------------------------------------------------------------------
def reference_forward(x, raw):
    h = jnp.transpose(x, (0, 2, 1))                       # (B, C, L)  -- x.transpose(1, 2)

    def conv1d(h, w, b, d, pad):
        out = jax.lax.conv_general_dilated(
            h, w, window_strides=(1,), padding=[(pad, pad)], rhs_dilation=(d,),
            dimension_numbers=('NCH', 'OIH', 'NCH'))
        return out + b[None, :, None]

    def bn(h, g, be):  # eval mode, running mean=0 / var=1
        return g[None, :, None] * h / jnp.sqrt(1.0 + BN_EPS) + be[None, :, None]

    for blk, p in enumerate(raw['blocks']):
        d = DILATIONS[blk]
        o = jax.nn.relu(bn(conv1d(h, p['w1'], p['b1'], d, d), p['g1'], p['be1']))
        o = jax.nn.relu(bn(conv1d(o, p['w2'], p['b2'], d, d), p['g2'], p['be2']))
        if 'ds_w' in p:
            res = bn(conv1d(h, p['ds_w'], p['ds_b'], 1, 0), p['ds_g'], p['ds_be'])
        else:
            res = h
        h = o + res

    w_att = jax.nn.softmax(jnp.mean(h, axis=1, keepdims=True), axis=2)  # (B, 1, L)
    pooled = jnp.sum(h * w_att, axis=2)                                  # (B, C)

    fc = raw['fc']
    z = pooled @ fc['fc1_w'].T + fc['fc1_b']
    z = fc['g'] * z / jnp.sqrt(1.0 + BN_EPS) + fc['be']
    z = z * jax.nn.sigmoid(z)                                            # SiLU
    return z @ fc['fc2_w'].T + fc['fc2_b']


# ----------------------------------------------------------------------------------
if __name__ == "__main__":
    # small but representative shapes: batch=16 (tiled 8 per grid step), seq=24,
    # input_dim=5, tcn_channels=32, fc_dim=16
    B, TB, L, D_IN, C, F = 16, 8, 24, 5, 32, 16

    key = jax.random.PRNGKey(0)
    kx, kp = jax.random.split(key)
    x = jax.random.normal(kx, (B, L, D_IN), jnp.float32)   # model input: (B, seq, input_dim)

    raw = make_params(kp, D_IN, C, F)
    ref = jax.block_until_ready(reference_forward(x, raw))

    # 1) strict check: f32 MXU operands must match the PyTorch-semantics reference
    out_f32 = jax.block_until_ready(
        eth_spot_forward(x, fold_params(raw, jnp.float32), batch_tile=TB))
    assert out_f32.shape == (B, 1), out_f32.shape
    np.testing.assert_allclose(np.asarray(out_f32), np.asarray(ref), rtol=5e-3, atol=5e-3)

    # 2) fast path: bf16 MXU operands (f32 accumulation, f32 elementwise).  Looser
    #    tolerance only accounts for bf16 operand rounding through the 8-conv chain.
    out_bf16 = jax.block_until_ready(
        eth_spot_forward(x, fold_params(raw, jnp.bfloat16), batch_tile=TB))
    np.testing.assert_allclose(np.asarray(out_bf16), np.asarray(ref), rtol=1e-1, atol=1e-1)

    print("KERNEL_OK")
</pallas_src>

<mosaic_0001>
module attributes {stable_mosaic.version = 11 : i64} {
  func.func @probe(%arg0: memref<8x128xf32, #tpu.memory_space<vmem>>, %arg1: memref<8x128xf32, #tpu.memory_space<vmem>>) attributes {dimension_semantics = [], scalar_prefetch = 0 : i64, scratch_operands = 0 : i64, tpu.core_type = #tpu.core_type<tc>} {
    %c0 = arith.constant 0 : index
    %c0_0 = arith.constant 0 : index
    %0 = vector.load %arg0[%c0, %c0_0] : memref<8x128xf32, #tpu.memory_space<vmem>>, vector<8x128xf32>
    %c1_i32 = arith.constant 1 : i32
    %1 = tpu.dynamic_rotate %0 by %c1_i32 dim 0 : vector<8x128xf32>, i32 -> vector<8x128xf32>
    %c0_1 = arith.constant 0 : index
    %c0_2 = arith.constant 0 : index
    %2 = vector.load %arg1[%c0_1, %c0_2] : memref<8x128xf32, #tpu.memory_space<vmem>>, vector<8x128xf32>
    tpu.vector_store %arg1[%c0_1, %c0_2], %1 {strides = array<i32>} : memref<8x128xf32, #tpu.memory_space<vmem>>, vector<8x128xf32>,
    return
  }
}

</mosaic_0001>

<llo_original>
// kernel: tpu_custom_call.1
$region0: #{tpu_custom_call.1}
  #allocation0 [shape = 'u32[]', space=smem, size = 0x4, offset = 0x4, fixed_abs, tag = 'smem constant byte address 0x4 - core index']
  #allocation1 [shape = 'u32[144,128]{1,0:T(1,128)}', space=vmem, size = 0x12000, scoped, tag = 'internal scratch']
  %s0 = inlined_call_operand.hbm [shape: f32[8,128], index: 0, kind: input, shape index: {}]
  %s1 = inlined_call_operand.hbm [shape: f32[8,128], index: 1, kind: output, shape index: {}]
  %s2 = sld [smem:[#allocation0]]
  $region18: #{tpu_custom_call.1} parent=0
    _
  %s4 = ssub.s32 1, %s2
  %s5 = scalar_select 0, %s4, %s2
  $region1: #{tpu_custom_call.1} parent=0
    #allocation2 [shape = 'u8[4096]{0}', space=vmem, size = 0x1000, scoped, tag = 'input window, operand 0, single buffered']
    #allocation3 [shape = 's32[1]{0}', space=sflag, size = 0x4, scoped, tag = 'scoped memory for tpu_custom_call.1']
    #allocation4 [shape = 's32[1]{0}', space=sflag, size = 0x4, scoped, tag = 'scoped memory for tpu_custom_call.1']
    #allocation5 [shape = 'u8[4096]{0}', space=vmem, size = 0x1000, scoped, tag = 'output window, operand 0, single buffered']
    %6 = vsyncpa [#allocation3], 0
    %7 = vsyncpa [#allocation4], 0
    // Predicated region
    $region2: #{tpu_custom_call.1} parent=1 // pred_check
      _
    $region3: #{tpu_custom_call.1} parent=1 // pred_check_branch
      %9 = sbr.rel (0) target = $region5
    $region4: #{tpu_custom_call.1} parent=1 // pred_region
      %s11 = ssub.s32 128, 128
      %12 = vsyncadd [#allocation3], %s11
      %s14 = sshll.u32 [#allocation2], 4
      %s15 = int_to_ptr.vmem [resolvable:$true] %s14
      %17 = dma.hbm_to_vmem [thread:$0]  %s0, 128, %s15, [#allocation3]
    $region5: #{tpu_custom_call.1} parent=1 // pred_fallthru
      _
    // Predicated region
    $region6: #{tpu_custom_call.1} parent=1 // pred_check
      _
    $region7: #{tpu_custom_call.1} parent=1 // pred_check_branch
      %19 = sbr.rel (0) target = $region9
    $region8: #{tpu_custom_call.1} parent=1 // pred_region
      %20 = dma.done [#allocation3], 128
    $region9: #{tpu_custom_call.1} parent=1 // pred_fallthru
      _
    %v21 = vld [vmem:[#allocation2] sm:$0xff]
    %v22 = vrot.slane %v21, 7
    %23 = vst [vmem:[#allocation5] sm:$0xff] %v22
    // Predicated region
    $region10: #{tpu_custom_call.1} parent=1 // pred_check
      _
    $region11: #{tpu_custom_call.1} parent=1 // pred_check_branch
      %25 = sbr.rel (0) target = $region13
    $region12: #{tpu_custom_call.1} parent=1 // pred_region
      %s27 = ssub.s32 128, 128
      %28 = vsyncadd [#allocation4], %s27
      %s30 = sshll.u32 [#allocation5], 4
      %s31 = int_to_ptr.vmem [resolvable:$true] %s30
      %33 = dma.vmem_to_hbm [thread:$0]  %s31, 128, %s1, [#allocation4]
    $region13: #{tpu_custom_call.1} parent=1 // pred_fallthru
      _
    // Predicated region
    $region14: #{tpu_custom_call.1} parent=1 // pred_check
      _
    $region15: #{tpu_custom_call.1} parent=1 // pred_check_branch
      %35 = sbr.rel (0) target = $region17
    $region16: #{tpu_custom_call.1} parent=1 // pred_region
      %36 = dma.done [#allocation4], 128
    $region17: #{tpu_custom_call.1} parent=1 // pred_fallthru
      _
    %37 = vsyncpa [#allocation3], 1
    %38 = vsyncpa [#allocation4], 1

</llo_original>
